<compile_context>
chip_gen: v7x
topology: tpu7x:2x2x1
jax: 0.10.0
libtpu: 0.0.40
codegen_flags: <defaults>
</compile_context>

<pallas_src>
import functools

import jax
import jax.numpy as jnp
from jax import lax
from jax.experimental import pallas as pl
from jax.experimental.pallas import tpu as pltpu


def _round_up(x, m):
    return ((x + m - 1) // m) * m


def _pick_tile_m(hw, tile_m_max):
    """Largest multiple-of-16 divisor of hw <= tile_m_max; else round hw up to 16."""
    cap = max(16, (min(tile_m_max, hw) // 16) * 16)
    for t in range(cap, 0, -16):
        if hw % t == 0:
            return t
    return min(_round_up(hw, 16), max(16, (tile_m_max // 16) * 16))


def _pick_chunk(tile_m):
    """Row-chunk (<=128, multiple of 8) dividing tile_m -> register-resident sub-blocks."""
    for c in (128, 64, 32, 16, 8):
        if tile_m % c == 0:
            return c
    return tile_m


def _stream_spec(shape, index_map, buffers):
    """BlockSpec for the patch stream; request deeper pipelining when available."""
    if buffers > 2 and hasattr(pl, "Buffered"):
        try:
            return pl.BlockSpec(shape, index_map, pipeline_mode=pl.Buffered(buffers))
        except TypeError:
            pass
    return pl.BlockSpec(shape, index_map)


# ----------------------------------------------------------------------------
# Fused kernel.
# Grid = (N, S, MT_split):
#   axis 0 (batch)        : "parallel"
#   axis 1 (spatial split): "parallel"  -> feeds v7x's 2nd TensorCore at small batch
#   axis 2 (spatial tiles): "arbitrary" -> reduction axis for the GAP accumulator
# ----------------------------------------------------------------------------
def _fused_conv_gap_head_kernel(p_ref, wc_ref, bc_ref, wh_ref, bh_ref,
                                o_ref, acc_ref, *, hw, pad_rows, tile_m, chunk):
    # p_ref : [1, TILE_M, K_pad]  bf16 im2col rows (one sample / one spatial tile)
    # wc_ref: [K_pad, C_pad]      bf16 flattened conv weights (zero padded)
    # bc_ref: [1, C_pad]          f32  conv bias (zero padded)
    # wh_ref: [C_pad, NC_pad]     bf16 head weights (zero padded)
    # bh_ref: [1, NC_pad]         f32  head bias (zero padded)
    # o_ref : [1, 1, NC_pad]      f32  partial logits for this (sample, split)
    # acc_ref: VMEM [8, C_pad]    f32  per-(sample, split) channel-sum accumulator
    m = pl.program_id(2)
    s = pl.program_id(1)
    c_pad = acc_ref.shape[1]

    @pl.when(m == 0)
    def _():
        acc_ref[...] = jnp.zeros_like(acc_ref)

    # Conv as matmul on the MXU, processed in register-resident row chunks so the f32
    # intermediate never round-trips VMEM between dot / bias+ReLU / partial reduce.
    n_chunks = tile_m // chunk

    def body(c, part):
        r0 = pl.multiple_of(c * chunk, chunk)
        rows = p_ref[0, pl.ds(r0, chunk), :]                         # bf16 [chunk, K_pad]
        conv = jnp.dot(rows, wc_ref[...],
                       preferred_element_type=jnp.float32)           # [chunk, C_pad]
        conv = jnp.maximum(conv + bc_ref[...], 0.0)                  # bias + ReLU (f32)
        # fold into 8 sublanes (no per-chunk cross-sublane XLU reduce)
        return part + conv.reshape(chunk // 8, 8, c_pad).sum(axis=0)

    part = lax.fori_loop(0, n_chunks, body,
                         jnp.zeros((8, c_pad), jnp.float32), unroll=True)
    acc_ref[...] += part                                             # full-width stores

    @pl.when(m == pl.num_programs(2) - 1)
    def _():
        csum = acc_ref[...].sum(axis=0, keepdims=True)               # single XLU reduce
        if pad_rows:
            # Zero-padded patch rows contribute relu(bias) each; remove exactly once.
            gate = (s == pl.num_programs(1) - 1).astype(jnp.float32)
            csum = csum - (gate * float(pad_rows)) * jnp.maximum(bc_ref[...], 0.0)
        pooled = (csum * (1.0 / float(hw))).astype(jnp.bfloat16)     # GAP mean
        logits = jnp.dot(pooled, wh_ref[...],
                         preferred_element_type=jnp.float32)         # adjusted head
        logits = logits + (s == 0).astype(jnp.float32) * bh_ref[...]
        o_ref[0] = logits                                            # [1, NC_pad]


# ----------------------------------------------------------------------------
# Wrapper mirroring BaseModelWrapper.forward(x)
# ----------------------------------------------------------------------------
def fused_forward(x_nchw, w_conv, b_conv, w_head, b_head, *,
                  tile_m_max=1024, patch_buffers=3):
    """x_nchw: [N, C_in, H, W]; w_conv: [C_out, C_in, 3, 3]; b_conv: [C_out];
       w_head: [num_classes, C_out] (torch layout); b_head: [num_classes]."""
    N, C_in, H, W = x_nchw.shape
    C_out = w_conv.shape[0]
    num_classes = w_head.shape[0]
    HW = H * W
    K = C_in * 9

    K_pad = _round_up(K, 16)            # bf16 sublane pairs on the RHS operand
    C_pad = _round_up(C_out, 128)       # lane-dense channels
    NC_pad = _round_up(num_classes, 128)

    # v7x (64 MiB VMEM) guard for deep layers: cap the tile when K is large.
    if K_pad >= 1024:
        tile_m_max = min(tile_m_max, 512)

    TILE_M = _pick_tile_m(HW, tile_m_max)
    CHUNK = _pick_chunk(TILE_M)
    MT_raw = pl.cdiv(HW, TILE_M)
    S = 2 if MT_raw >= 2 else 1                 # spatial split for the 2nd TC (v7x)
    MT_total = _round_up(MT_raw, S)
    MT_split = MT_total // S
    HW_pad = MT_total * TILE_M
    pad_rows = HW_pad - HW                      # zero rows, corrected at finalize

    # --- patch (im2col) producer: built entirely in bf16, fused under jit ---
    x_bf = x_nchw.astype(jnp.bfloat16)
    x_nhwc = jnp.transpose(x_bf, (0, 2, 3, 1))                       # [N, H, W, C_in]
    xp = jnp.pad(x_nhwc, ((0, 0), (1, 1), (1, 1), (0, 0)))
    patches = jnp.concatenate(
        [xp[:, kh:kh + H, kw:kw + W, :] for kh in range(3) for kw in range(3)],
        axis=-1).reshape(N, HW, K)                                   # (kh, kw, ci) order
    patches = jnp.pad(patches, ((0, 0), (0, HW_pad - HW), (0, K_pad - K)))

    # Conv weights flattened in the same (kh, kw, ci) order, zero padded, bf16.
    w_mat = jnp.transpose(w_conv, (2, 3, 1, 0)).reshape(K, C_out)
    w_mat = jnp.pad(w_mat, ((0, K_pad - K), (0, C_pad - C_out))).astype(jnp.bfloat16)
    b_mat = jnp.pad(b_conv, (0, C_pad - C_out)).reshape(1, C_pad).astype(jnp.float32)

    # Adjusted output layer; bf16 weights halve resident-param VMEM (f32 accumulation).
    wh = jnp.pad(w_head.T, ((0, C_pad - C_out), (0, NC_pad - num_classes))
                 ).astype(jnp.bfloat16)
    bh = jnp.pad(b_head, (0, NC_pad - num_classes)).reshape(1, NC_pad).astype(jnp.float32)

    kernel = functools.partial(_fused_conv_gap_head_kernel,
                               hw=HW, pad_rows=pad_rows, tile_m=TILE_M, chunk=CHUNK)

    # Explicit VMEM budget (v5e default scoped limit is 16 MiB, v7x physical 64 MiB).
    patch_bytes = max(patch_buffers, 2) * TILE_M * K_pad * 2
    param_bytes = 2 * (K_pad * C_pad * 2 + 8 * C_pad * 4
                       + C_pad * NC_pad * 2 + 8 * NC_pad * 4)
    misc_bytes = 2 * 8 * NC_pad * 4 + 8 * C_pad * 4
    est = patch_bytes + param_bytes + misc_bytes
    vmem_limit = int(min(64 * 2 ** 20, max(32 * 2 ** 20, 2 * est + (4 << 20))))

    cost = pl.CostEstimate(
        flops=2 * N * HW_pad * K_pad * C_pad + 2 * N * S * C_pad * NC_pad,
        transcendentals=0,
        bytes_accessed=(patches.size * 2 + w_mat.size * 2 + wh.size * 2
                        + b_mat.size * 4 + bh.size * 4 + N * S * NC_pad * 4))

    out = pl.pallas_call(
        kernel,
        out_shape=jax.ShapeDtypeStruct((N * S, 1, NC_pad), jnp.float32),
        grid_spec=pltpu.PrefetchScalarGridSpec(
            num_scalar_prefetch=0,
            grid=(N, S, MT_split),
            in_specs=[
                # im2col rows: one sample, one spatial tile per step (pipelined stream).
                _stream_spec((1, TILE_M, K_pad),
                             lambda n, s, m: (n, s * MT_split + m, 0),
                             patch_buffers),
                # small parameters, resident across the grid.
                pl.BlockSpec((K_pad, C_pad), lambda n, s, m: (0, 0)),
                pl.BlockSpec((1, C_pad), lambda n, s, m: (0, 0)),
                pl.BlockSpec((C_pad, NC_pad), lambda n, s, m: (0, 0)),
                pl.BlockSpec((1, NC_pad), lambda n, s, m: (0, 0)),
            ],
            out_specs=pl.BlockSpec((1, 1, NC_pad), lambda n, s, m: (n * S + s, 0, 0)),
            scratch_shapes=[pltpu.VMEM((8, C_pad), jnp.float32)],
        ),
        compiler_params=pltpu.CompilerParams(
            dimension_semantics=("parallel", "parallel", "arbitrary"),
            vmem_limit_bytes=vmem_limit),
        cost_estimate=cost,
    )(patches, w_mat, b_mat, wh, bh)

    # Combine per-split partial logits (linear), drop padded classes.
    return out.reshape(N, S, NC_pad).sum(axis=1)[:, :num_classes]


_fused_forward_jit = jax.jit(fused_forward,
                             static_argnames=("tile_m_max", "patch_buffers"))


def run_forward(x, w_conv, b_conv, w_head, b_head, *, tile_m_max=1024):
    """Try 3-deep buffering on the patch stream; fall back to default double-buffering."""
    try:
        out = _fused_forward_jit(x, w_conv, b_conv, w_head, b_head,
                                 tile_m_max=tile_m_max, patch_buffers=3)
        jax.block_until_ready(out)
        return out
    except Exception:
        out = _fused_forward_jit(x, w_conv, b_conv, w_head, b_head,
                                 tile_m_max=tile_m_max, patch_buffers=2)
        jax.block_until_ready(out)
        return out


class BaseModelWrapperPallas:
    def __init__(self, num_classes=10, c_in=3, c_hidden=32, seed=0):
        k = jax.random.PRNGKey(seed)
        k1, k2, k3, k4 = jax.random.split(k, 4)
        # deterministic synthetic parameters (shapes follow the module's __init__)
        self.w_conv = jax.random.normal(k1, (c_hidden, c_in, 3, 3), jnp.float32) * 0.1
        self.b_conv = jax.random.normal(k2, (c_hidden,), jnp.float32) * 0.1
        # adjusted output layer: nn.Linear(in_features=c_hidden, num_classes)
        self.w_head = jax.random.normal(k3, (num_classes, c_hidden), jnp.float32) * 0.1
        self.b_head = jax.random.normal(k4, (num_classes,), jnp.float32) * 0.1

    def __call__(self, x_nchw, *, tile_m_max=1024):
        return run_forward(x_nchw, self.w_conv, self.b_conv, self.w_head, self.b_head,
                           tile_m_max=tile_m_max)


# ----------------------------------------------------------------------------
# Plain-JAX reference (f32) for correctness checking.
# ----------------------------------------------------------------------------
def reference_forward(x_nchw, w_conv, b_conv, w_head, b_head):
    conv = lax.conv_general_dilated(
        x_nchw, w_conv, window_strides=(1, 1), padding="SAME",
        dimension_numbers=("NCHW", "OIHW", "NCHW"))
    feat = jnp.maximum(conv + b_conv[None, :, None, None], 0.0)
    pooled = feat.mean(axis=(2, 3))                     # global average pool
    return pooled @ w_head.T + b_head


if __name__ == "__main__":
    key = jax.random.PRNGKey(0)
    kx1, kx2 = jax.random.split(key)
    model = BaseModelWrapperPallas(num_classes=10, c_in=3, c_hidden=32, seed=0)

    # 1) H*W divisible by the tile: single tile, no split, no padded rows.
    x = jax.random.normal(kx1, (2, 3, 16, 16), jnp.float32)
    logits = model(x)
    jax.block_until_ready(logits)
    assert logits.shape == (2, 10), logits.shape
    assert logits.dtype == jnp.float32
    ref = reference_forward(x, model.w_conv, model.b_conv, model.w_head, model.b_head)
    jax.block_until_ready(ref)
    assert jnp.allclose(logits, ref, atol=5e-2, rtol=5e-2), (logits, ref)

    # 2) small tile cap -> multi-tile grid with the 2-way "parallel" spatial split.
    logits2 = model(x, tile_m_max=64)
    jax.block_until_ready(logits2)
    assert jnp.allclose(logits2, ref, atol=5e-2, rtol=5e-2), (logits2, ref)

    # 3) ragged H*W -> zero-padded patch rows + relu(bias) correction path.
    x3 = jax.random.normal(kx2, (2, 3, 10, 10), jnp.float32)
    logits3 = model(x3)
    jax.block_until_ready(logits3)
    ref3 = reference_forward(x3, model.w_conv, model.b_conv, model.w_head, model.b_head)
    jax.block_until_ready(ref3)
    assert jnp.allclose(logits3, ref3, atol=5e-2, rtol=5e-2), (logits3, ref3)

    print("KERNEL_OK")
</pallas_src>

<mosaic_0001>
module attributes {stable_mosaic.version = 11 : i64} {
  func.func @_fused_conv_gap_head_kernel(%arg0: i32, %arg1: i32, %arg2: i32, %arg3: memref<1x256x32xbf16, #tpu.memory_space<vmem>>, %arg4: memref<32x128xbf16, #tpu.memory_space<vmem>>, %arg5: memref<1x128xf32, #tpu.memory_space<vmem>>, %arg6: memref<128x128xbf16, #tpu.memory_space<vmem>>, %arg7: memref<1x128xf32, #tpu.memory_space<vmem>>, %arg8: memref<1x1x128xf32, #tpu.memory_space<vmem>>, %arg9: memref<8x128xf32, #tpu.memory_space<vmem>>) attributes {dimension_semantics = [#tpu.dimension_semantics<parallel>, #tpu.dimension_semantics<parallel>, #tpu.dimension_semantics<arbitrary>], iteration_bounds = array<i64: 2, 1, 1>, scalar_prefetch = 0 : i64, scratch_operands = 1 : i64, tpu.core_type = #tpu.core_type<tc>, window_params = [{transform_indices = @transform_0, window_bounds = array<i64: 1, 256, 32>}, {pipeline_mode = #tpu.pipeline_mode<synchronous>, transform_indices = @transform_1, window_bounds = array<i64: 32, 128>}, {pipeline_mode = #tpu.pipeline_mode<synchronous>, transform_indices = @transform_2, window_bounds = array<i64: 1, 128>}, {pipeline_mode = #tpu.pipeline_mode<synchronous>, transform_indices = @transform_3, window_bounds = array<i64: 128, 128>}, {pipeline_mode = #tpu.pipeline_mode<synchronous>, transform_indices = @transform_4, window_bounds = array<i64: 1, 128>}, {transform_indices = @transform_5, window_bounds = array<i64: 1, 1, 128>}]} {
    %c0_i32 = arith.constant 0 : i32
    %0 = arith.cmpi eq, %arg2, %c0_i32 : i32
    %1 = arith.extui %0 : i1 to i32
    %c0_i32_0 = arith.constant 0 : i32
    %2 = arith.cmpi ne, %1, %c0_i32_0 : i32
    scf.if %2 {
      %cst_26 = arith.constant 0.000000e+00 : f32
      %40 = vector.broadcast %cst_26 : f32 to vector<8x128xf32>
      %c0_27 = arith.constant 0 : index
      %c0_28 = arith.constant 0 : index
      %41 = vector.load %arg9[%c0_27, %c0_28] : memref<8x128xf32, #tpu.memory_space<vmem>>, vector<8x128xf32>
      tpu.vector_store %arg9[%c0_27, %c0_28], %40 {strides = array<i32>} : memref<8x128xf32, #tpu.memory_space<vmem>>, vector<8x128xf32>,
    } else {
    }
    %cst = arith.constant 0.000000e+00 : f32
    %3 = vector.broadcast %cst : f32 to vector<8x128xf32>
    %c0_i32_1 = arith.constant 0 : i32
    %c128_i32 = arith.constant 128 : i32
    %4 = arith.muli %c0_i32_1, %c128_i32 : i32
    %5 = tpu.assume_multiple %4, 128 : i32
    %c0 = arith.constant 0 : index
    %6 = arith.index_cast %5 : i32 to index
    %c0_2 = arith.constant 0 : index
    %7 = vector.load %arg3[%c0, %6, %c0_2] : memref<1x256x32xbf16, #tpu.memory_space<vmem>>, vector<1x128x32xbf16>
    %8 = vector.shape_cast %7 : vector<1x128x32xbf16> to vector<128x32xbf16>
    %c0_3 = arith.constant 0 : index
    %c0_4 = arith.constant 0 : index
    %9 = vector.load %arg4[%c0_3, %c0_4] : memref<32x128xbf16, #tpu.memory_space<vmem>>, vector<32x128xbf16>
    %cst_5 = arith.constant dense<0.000000e+00> : vector<128x128xf32>
    %10 = tpu.matmul %8, %9, %cst_5 {dimension_numbers = #tpu.dot_dimension_numbers<[1], [0], [0], [1], [0, 0, 1, 1], [], []>} : vector<128x32xbf16>, vector<32x128xbf16>, vector<128x128xf32> -> vector<128x128xf32>
    %c0_6 = arith.constant 0 : index
    %c0_7 = arith.constant 0 : index
    %11 = vector.load %arg5[%c0_6, %c0_7] : memref<1x128xf32, #tpu.memory_space<vmem>>, vector<1x128xf32>
    %12 = vector.broadcast %11 : vector<1x128xf32> to vector<128x128xf32>
    %13 = arith.addf %10, %12 : vector<128x128xf32>
    %cst_8 = arith.constant 0.000000e+00 : f32
    %14 = vector.broadcast %cst_8 : f32 to vector<128x128xf32>
    %15 = arith.maximumf %13, %14 : vector<128x128xf32>
    %16 = vector.shape_cast %15 : vector<128x128xf32> to vector<16x8x128xf32>
    %cst_9 = arith.constant dense<0.000000e+00> : vector<8x128xf32>
    %17 = vector.multi_reduction <add>, %16, %cst_9 [0] : vector<16x8x128xf32> to vector<8x128xf32>
    %18 = arith.addf %3, %17 : vector<8x128xf32>
    %c1_i32 = arith.constant 1 : i32
    %c128_i32_10 = arith.constant 128 : i32
    %19 = arith.muli %c1_i32, %c128_i32_10 : i32
    %20 = tpu.assume_multiple %19, 128 : i32
    %c0_11 = arith.constant 0 : index
    %21 = arith.index_cast %20 : i32 to index
    %c0_12 = arith.constant 0 : index
    %22 = vector.load %arg3[%c0_11, %21, %c0_12] : memref<1x256x32xbf16, #tpu.memory_space<vmem>>, vector<1x128x32xbf16>
    %23 = vector.shape_cast %22 : vector<1x128x32xbf16> to vector<128x32xbf16>
    %c0_13 = arith.constant 0 : index
    %c0_14 = arith.constant 0 : index
    %24 = vector.load %arg4[%c0_13, %c0_14] : memref<32x128xbf16, #tpu.memory_space<vmem>>, vector<32x128xbf16>
    %cst_15 = arith.constant dense<0.000000e+00> : vector<128x128xf32>
    %25 = tpu.matmul %23, %24, %cst_15 {dimension_numbers = #tpu.dot_dimension_numbers<[1], [0], [0], [1], [0, 0, 1, 1], [], []>} : vector<128x32xbf16>, vector<32x128xbf16>, vector<128x128xf32> -> vector<128x128xf32>
    %c0_16 = arith.constant 0 : index
    %c0_17 = arith.constant 0 : index
    %26 = vector.load %arg5[%c0_16, %c0_17] : memref<1x128xf32, #tpu.memory_space<vmem>>, vector<1x128xf32>
    %27 = vector.broadcast %26 : vector<1x128xf32> to vector<128x128xf32>
    %28 = arith.addf %25, %27 : vector<128x128xf32>
    %cst_18 = arith.constant 0.000000e+00 : f32
    %29 = vector.broadcast %cst_18 : f32 to vector<128x128xf32>
    %30 = arith.maximumf %28, %29 : vector<128x128xf32>
    %31 = vector.shape_cast %30 : vector<128x128xf32> to vector<16x8x128xf32>
    %cst_19 = arith.constant dense<0.000000e+00> : vector<8x128xf32>
    %32 = vector.multi_reduction <add>, %31, %cst_19 [0] : vector<16x8x128xf32> to vector<8x128xf32>
    %33 = arith.addf %18, %32 : vector<8x128xf32>
    %c2_i32 = arith.constant 2 : i32
    %c0_20 = arith.constant 0 : index
    %c0_21 = arith.constant 0 : index
    %34 = vector.load %arg9[%c0_20, %c0_21] : memref<8x128xf32, #tpu.memory_space<vmem>>, vector<8x128xf32>
    %35 = arith.addf %34, %33 : vector<8x128xf32>
    %c0_22 = arith.constant 0 : index
    %c0_23 = arith.constant 0 : index
    %36 = vector.load %arg9[%c0_22, %c0_23] : memref<8x128xf32, #tpu.memory_space<vmem>>, vector<8x128xf32>
    tpu.vector_store %arg9[%c0_22, %c0_23], %35 {strides = array<i32>} : memref<8x128xf32, #tpu.memory_space<vmem>>, vector<8x128xf32>,
    %c0_i32_24 = arith.constant 0 : i32
    %37 = arith.cmpi eq, %arg2, %c0_i32_24 : i32
    %38 = arith.extui %37 : i1 to i32
    %c0_i32_25 = arith.constant 0 : i32
    %39 = arith.cmpi ne, %38, %c0_i32_25 : i32
    scf.if %39 {
      %c0_26 = arith.constant 0 : index
      %c0_27 = arith.constant 0 : index
      %40 = vector.load %arg9[%c0_26, %c0_27] : memref<8x128xf32, #tpu.memory_space<vmem>>, vector<8x128xf32>
      %cst_28 = arith.constant dense<0.000000e+00> : vector<128xf32>
      %41 = vector.multi_reduction <add>, %40, %cst_28 [0] : vector<8x128xf32> to vector<128xf32>
      %42 = vector.shape_cast %41 : vector<128xf32> to vector<1x128xf32>
      %cst_29 = arith.constant 3.906250e-03 : f32
      %43 = vector.broadcast %cst_29 : f32 to vector<1x128xf32>
      %44 = arith.mulf %42, %43 : vector<1x128xf32>
      %45 = arith.truncf %44 : vector<1x128xf32> to vector<1x128xbf16>
      %c0_30 = arith.constant 0 : index
      %c0_31 = arith.constant 0 : index
      %46 = vector.load %arg6[%c0_30, %c0_31] : memref<128x128xbf16, #tpu.memory_space<vmem>>, vector<128x128xbf16>
      %cst_32 = arith.constant dense<0.000000e+00> : vector<1x128xf32>
      %47 = tpu.matmul %45, %46, %cst_32 {dimension_numbers = #tpu.dot_dimension_numbers<[1], [0], [0], [1], [0, 0, 1, 1], [], []>} : vector<1x128xbf16>, vector<128x128xbf16>, vector<1x128xf32> -> vector<1x128xf32>
      %c0_i32_33 = arith.constant 0 : i32
      %48 = arith.cmpi eq, %arg1, %c0_i32_33 : i32
      %49 = arith.extui %48 : i1 to i32
      %50 = arith.sitofp %49 : i32 to f32
      %c0_34 = arith.constant 0 : index
      %c0_35 = arith.constant 0 : index
      %51 = vector.load %arg7[%c0_34, %c0_35] : memref<1x128xf32, #tpu.memory_space<vmem>>, vector<1x128xf32>
      %52 = vector.broadcast %50 : f32 to vector<1x128xf32>
      %53 = arith.mulf %52, %51 : vector<1x128xf32>
      %54 = arith.addf %47, %53 : vector<1x128xf32>
      %c0_36 = arith.constant 0 : index
      %c0_37 = arith.constant 0 : index
      %c0_38 = arith.constant 0 : index
      %55 = vector.load %arg8[%c0_36, %c0_37, %c0_38] : memref<1x1x128xf32, #tpu.memory_space<vmem>>, vector<1x1x128xf32>
      %56 = vector.shape_cast %55 : vector<1x1x128xf32> to vector<1x128xf32>
      %57 = vector.shape_cast %54 : vector<1x128xf32> to vector<1x1x128xf32>
      tpu.vector_store %arg8[%c0_36, %c0_37, %c0_38], %57 {strides = array<i32>} : memref<1x1x128xf32, #tpu.memory_space<vmem>>, vector<1x1x128xf32>,
    } else {
    }
    return
  }
  func.func @transform_0(%arg0: i32, %arg1: i32, %arg2: i32) -> (i32, i32, i32) {
    %c1_i32 = arith.constant 1 : i32
    %0 = arith.muli %arg1, %c1_i32 : i32
    %1 = arith.addi %0, %arg2 : i32
    %c0_i32 = arith.constant 0 : i32
    %c0_i32_0 = arith.constant 0 : i32
    return %arg0, %1, %c0_i32 : i32, i32, i32
  }
  func.func @transform_1(%arg0: i32, %arg1: i32, %arg2: i32) -> (i32, i32) {
    %c0_i32 = arith.constant 0 : i32
    %c0_i32_0 = arith.constant 0 : i32
    %c0_i32_1 = arith.constant 0 : i32
    return %c0_i32, %c0_i32_0 : i32, i32
  }
  func.func @transform_2(%arg0: i32, %arg1: i32, %arg2: i32) -> (i32, i32) {
    %c0_i32 = arith.constant 0 : i32
    %c0_i32_0 = arith.constant 0 : i32
    %c0_i32_1 = arith.constant 0 : i32
    return %c0_i32, %c0_i32_0 : i32, i32
  }
  func.func @transform_3(%arg0: i32, %arg1: i32, %arg2: i32) -> (i32, i32) {
    %c0_i32 = arith.constant 0 : i32
    %c0_i32_0 = arith.constant 0 : i32
    %c0_i32_1 = arith.constant 0 : i32
    return %c0_i32, %c0_i32_0 : i32, i32
  }
  func.func @transform_4(%arg0: i32, %arg1: i32, %arg2: i32) -> (i32, i32) {
    %c0_i32 = arith.constant 0 : i32
    %c0_i32_0 = arith.constant 0 : i32
    %c0_i32_1 = arith.constant 0 : i32
    return %c0_i32, %c0_i32_0 : i32, i32
  }
  func.func @transform_5(%arg0: i32, %arg1: i32, %arg2: i32) -> (i32, i32, i32) {
    %c1_i32 = arith.constant 1 : i32
    %0 = arith.muli %arg0, %c1_i32 : i32
    %1 = arith.addi %0, %arg1 : i32
    %c0_i32 = arith.constant 0 : i32
    %c0_i32_0 = arith.constant 0 : i32
    %c0_i32_1 = arith.constant 0 : i32
    return %1, %c0_i32, %c0_i32_0 : i32, i32, i32
  }
}

</mosaic_0001>

<llo_original>
// kernel: fused_forward.1
$region0: #{fused_forward.1}
  #allocation0 [shape = 'u32[]', space=smem, size = 0x4, offset = 0x4, fixed_abs, tag = 'smem constant byte address 0x4 - core index']
  #allocation1 [shape = 'u32[144,128]{1,0:T(1,128)}', space=vmem, size = 0x12000, scoped, tag = 'internal scratch']
  #allocation2 [shape = 'f32[8,128]{1,0:T(8,128)}', space=vmem, size = 0x1000, scoped, tag = 'scratch operand']
  %s0 = inlined_call_operand.vmem [shape: bf16[2,256,32], index: 0, kind: input, shape index: {}]
  %s1 = inlined_call_operand.vmem [shape: bf16[32,128], index: 1, kind: input, shape index: {}]
  %s2 = inlined_call_operand.vmem [shape: f32[1,128], index: 2, kind: input, shape index: {}]
  %s3 = inlined_call_operand.vmem [shape: bf16[128,128], index: 3, kind: input, shape index: {}]
  %s4 = inlined_call_operand.vmem [shape: f32[1,128], index: 4, kind: input, shape index: {}]
  %s5 = inlined_call_operand.hbm [shape: f32[2,1,128], index: 5, kind: output, shape index: {}]
  %s6 = sld [smem:[#allocation0]]
  $region61: #{fused_forward.1} parent=0
    _
  %s8 = ssub.s32 1, %s6
  %s9 = scalar_select 0, %s8, %s6
  $region1: #{fused_forward.1} parent=0
    #allocation3 [shape = 'u8[1024]{0}', space=vmem, size = 0x400, scoped, tag = 'output window, operand 0']
    #allocation4 [shape = 's32[2]{0}', space=sflag, size = 0x8, scoped, tag = 'scoped memory for fused_forward.1']
    %10 = vsyncpa [#allocation4], 0
    %s11 = scalar_lea.sflag [#allocation4], 1
    %12 = vsyncpa %s11, 0
    loop: start=0, step=1, limit=4
    $region2: #{fused_forward.1} parent=1 // loop_pre_header
      _
    $region3: #{fused_forward.1} parent=1 // loop_header
      %s14 = sphi 0, %s18
      %p15 = scmp.ge.s32.totalorder %s14, 4
      %s21 = sphi 0, %s40
      %s22 = sphi 0, %s36
      %s23 = sphi 0, %s32
      %s24 = sphi 0, %s21
      %s25 = sphi 0, %s22
      %s26 = sphi 0, %s23
      %s27 = sphi 0, %s24
      %s28 = sphi 0, %s25
      %s29 = sphi 0, %s26
      %s47 = sphi 0, %s49
      %s50 = sphi 0, %s47
      %s51 = sphi 0, %s50
      %s67 = sphi 0, %s51
      %s71 = sphi 0, %s71
      %s73 = sphi 0, %s71
      %s74 = sphi 0, %s73
      %s88 = sphi 0, %s74
      %s92 = sphi 0, %s92
      %s94 = sphi 0, %s92
      %s95 = sphi 0, %s94
      %s109 = sphi 0, %s95
      %s113 = sphi 0, %s113
      %s115 = sphi 0, %s113
      %s116 = sphi 0, %s115
      %s130 = sphi 0, %s116
      %s134 = sphi 0, %s134
      %s136 = sphi 0, %s134
      %s137 = sphi 0, %s136
      %s151 = sphi 0, %s137
      %s159 = sphi 0, %s161
      %s162 = sphi 0, %s159
      %s163 = sphi 0, %s162
      %s179 = sphi 0, %s163
    $region4: #{fused_forward.1} parent=1 // loop_header_branch
      %17 = sbr.rel (%p15) target = $region8
    $region5: #{fused_forward.1} parent=1 // loop_body
      %s19 = ssub.s32 %s14, 1
      %s20 = ssub.s32 %s14, 2
      %s30 = sadd.s32 1, %s23
      %p31 = scmp.ge.s32.totalorder %s30, 1
      %s32 = scalar_select %p31, 0, %s30
      %s33 = sadd.s32 1, %s22
      %s34 = scalar_select %p31, %s33, %s22
      %p35 = scmp.ge.s32.totalorder %s34, 1
      %s36 = scalar_select %p35, 0, %s34
      %s37 = sadd.s32 1, %s21
      %s38 = scalar_select %p35, %s37, %s21
      %p39 = scmp.ge.s32.totalorder %s38, 2
      %s40 = scalar_select %p39, 0, %s38
      %s41 = sadd.s32 %s22, %s23
      %s42 = sadd.s32 %s36, %s32
      %s43 = ssub.s32 %s21, %s40
      %s44 = ssub.s32 %s41, %s42
      %s45 = sor.u32 %s43, %s44
      %p46 = scmp.eq.s32.totalorder %s45, 0
      %s48 = sadd.s32 %s47, 1
      %s49 = scalar_select %p46, %s47, %s48
      %p52 = pneg %p46
      %p53 = scmp.eq.s32.totalorder %s14, 1
      %p54 = por %p52, %p53
      %p55 = scmp.ne.s32.totalorder %s47, %s50
      %p56 = scmp.eq.s32.totalorder %s14, 0
      %p57 = por %p55, %p56
      %p58 = scmp.ne.s32.totalorder %s47, %s50
      %p59 = scmp.eq.s32.totalorder %s19, 1
      %p60 = por %p58, %p59
      %p61 = scmp.ne.s32.totalorder %s50, %s51
      %p62 = scmp.eq.s32.totalorder %s19, 0
      %p63 = por %p61, %p62
      %p64 = scmp.ne.s32.totalorder %s50, %s51
      %p65 = scmp.eq.s32.totalorder %s20, 1
      %p66 = por %p64, %p65
      %p68 = scmp.ne.s32.totalorder %s51, %s67
      %p69 = scmp.eq.s32.totalorder %s20, 0
      %p70 = por %p68, %p69
      %s72 = sadd.s32 %s71, 1
      %p75 = scmp.eq.s32.totalorder %s14, 1
      %p76 = scmp.ne.s32.totalorder %s71, %s73
      %p77 = scmp.eq.s32.totalorder %s14, 0
      %p78 = por %p76, %p77
      %p79 = scmp.ne.s32.totalorder %s71, %s73
      %p80 = scmp.eq.s32.totalorder %s19, 1
      %p81 = por %p79, %p80
      %p82 = scmp.ne.s32.totalorder %s73, %s74
      %p83 = scmp.eq.s32.totalorder %s19, 0
      %p84 = por %p82, %p83
      %p85 = scmp.ne.s32.totalorder %s73, %s74
      %p86 = scmp.eq.s32.totalorder %s20, 1
      %p87 = por %p85, %p86
      %p89 = scmp.ne.s32.totalorder %s74, %s88
      %p90 = scmp.eq.s32.totalorder %s20, 0
      %p91 = por %p89, %p90
      %s93 = sadd.s32 %s92, 1
      %p96 = scmp.eq.s32.totalorder %s14, 1
      %p97 = scmp.ne.s32.totalorder %s92, %s94
      %p98 = scmp.eq.s32.totalorder %s14, 0
      %p99 = por %p97, %p98
      %p100 = scmp.ne.s32.totalorder %s92, %s94
      %p101 = scmp.eq.s32.totalorder %s19, 1
      %p102 = por %p100, %p101
      %p103 = scmp.ne.s32.totalorder %s94, %s95
      %p104 = scmp.eq.s32.totalorder %s19, 0
      %p105 = por %p103, %p104
      %p106 = scmp.ne.s32.totalorder %s94, %s95
      %p107 = scmp.eq.s32.totalorder %s20, 1
      %p108 = por %p106, %p107
      %p110 = scmp.ne.s32.totalorder %s95, %s109
      %p111 = scmp.eq.s32.totalorder %s20, 0
      %p112 = por %p110, %p111
      %s114 = sadd.s32 %s113, 1
      %p117 = scmp.eq.s32.totalorder %s14, 1
      %p118 = scmp.ne.s32.totalorder %s113, %s115
      %p119 = scmp.eq.s32.totalorder %s14, 0
      %p120 = por %p118, %p119
      %p121 = scmp.ne.s32.totalorder %s113, %s115
      %p122 = scmp.eq.s32.totalorder %s19, 1
      %p123 = por %p121, %p122
      %p124 = scmp.ne.s32.totalorder %s115, %s116
      %p125 = scmp.eq.s32.totalorder %s19, 0
      %p126 = por %p124, %p125
      %p127 = scmp.ne.s32.totalorder %s115, %s116
      %p128 = scmp.eq.s32.totalorder %s20, 1
      %p129 = por %p127, %p128
      %p131 = scmp.ne.s32.totalorder %s116, %s130
      %p132 = scmp.eq.s32.totalorder %s20, 0
      %p133 = por %p131, %p132
      %s135 = sadd.s32 %s134, 1
      %p138 = scmp.eq.s32.totalorder %s14, 1
      %p139 = scmp.ne.s32.totalorder %s134, %s136
      %p140 = scmp.eq.s32.totalorder %s14, 0
      %p141 = por %p139, %p140
      %p142 = scmp.ne.s32.totalorder %s134, %s136
      %p143 = scmp.eq.s32.totalorder %s19, 1
      %p144 = por %p142, %p143
      %p145 = scmp.ne.s32.totalorder %s136, %s137
      %p146 = scmp.eq.s32.totalorder %s19, 0
      %p147 = por %p145, %p146
      %p148 = scmp.ne.s32.totalorder %s136, %s137
      %p149 = scmp.eq.s32.totalorder %s20, 1
      %p150 = por %p148, %p149
      %p152 = scmp.ne.s32.totalorder %s137, %s151
      %p153 = scmp.eq.s32.totalorder %s20, 0
      %p154 = por %p152, %p153
      %s155 = sadd.s32 %s21, %s22
      %s156 = sadd.s32 %s40, %s36
      %s157 = ssub.s32 %s155, %s156
      %p158 = scmp.eq.s32.totalorder %s157, 0
      %s160 = sadd.s32 %s159, 1
      %s161 = scalar_select %p158, %s159, %s160
      %p164 = pneg %p158
      %p165 = scmp.eq.s32.totalorder %s14, 1
      %p166 = por %p164, %p165
      %p167 = scmp.ne.s32.totalorder %s159, %s162
      %p168 = scmp.eq.s32.totalorder %s14, 0
      %p169 = por %p167, %p168
      %p170 = scmp.ne.s32.totalorder %s159, %s162
      %p171 = scmp.eq.s32.totalorder %s19, 1
      %p172 = por %p170, %p171
      %p173 = scmp.ne.s32.totalorder %s162, %s163
      %p174 = scmp.eq.s32.totalorder %s19, 0
      %p175 = por %p173, %p174
      %p176 = scmp.ne.s32.totalorder %s162, %s163
      %p177 = scmp.eq.s32.totalorder %s20, 1
      %p178 = por %p176, %p177
      %p180 = scmp.ne.s32.totalorder %s163, %s179
      %p181 = scmp.eq.s32.totalorder %s20, 0
      %p182 = por %p180, %p181
      %p183 = scmp.le.s32.totalorder 1, %s14
      %p184 = scmp.lt.s32.totalorder %s14, 3
      %p185 = pnand %p183, %p184
      %p186 = pneg %p185
      // Predicated region
      $region9: #{fused_forward.1} parent=5 // pred_check
        _
      $region10: #{fused_forward.1} parent=5 // pred_check_branch
        %188 = sbr.rel (%p185) target = $region12
      $region11: #{fused_forward.1} parent=5 // pred_region
        %s189 = ssub.s32 %s14, 1
        // Predicated region
        $region13: #{fused_forward.1} parent=11 // pred_check
          %p190 = pneg %p84
        $region14: #{fused_forward.1} parent=11 // pred_check_branch
          %192 = sbr.rel (%p190) target = $region16
        $region15: #{fused_forward.1} parent=11 // pred_region
          _
        $region16: #{fused_forward.1} parent=11 // pred_fallthru
          _
        // Predicated region
        $region17: #{fused_forward.1} parent=11 // pred_check
          %p193 = pneg %p105
        $region18: #{fused_forward.1} parent=11 // pred_check_branch
          %195 = sbr.rel (%p193) target = $region20
        $region19: #{fused_forward.1} parent=11 // pred_region
          _
        $region20: #{fused_forward.1} parent=11 // pred_fallthru
          _
        // Predicated region
        $region21: #{fused_forward.1} parent=11 // pred_check
          %p196 = pneg %p126
        $region22: #{fused_forward.1} parent=11 // pred_check_branch
          %198 = sbr.rel (%p196) target = $region24
        $region23: #{fused_forward.1} parent=11 // pred_region
          _
        $region24: #{fused_forward.1} parent=11 // pred_fallthru
          _
        // Predicated region
        $region25: #{fused_forward.1} parent=11 // pred_check
          %p199 = pneg %p147
        $region26: #{fused_forward.1} parent=11 // pred_check_branch
          %201 = sbr.rel (%p199) target = $region28
        $region27: #{fused_forward.1} parent=11 // pred_region
          _
        $region28: #{fused_forward.1} parent=11 // pred_fallthru
          _
      $region12: #{fused_forward.1} parent=5 // pred_fallthru
        _
      %p202 = scmp.lt.s32.totalorder %s14, 2
      // Predicated region
      $region29: #{fused_forward.1} parent=5 // pred_check
        %p203 = pneg %p202
      $region30: #{fused_forward.1} parent=5 // pred_check_branch
        %205 = sbr.rel (%p203) target = $region32
      $region31: #{fused_forward.1} parent=5 // pred_region
        // Predicated region
        $region33: #{fused_forward.1} parent=31 // pred_check
          %p206 = pneg %p57
        $region34: #{fused_forward.1} parent=31 // pred_check_branch
          %208 = sbr.rel (%p206) target = $region36
        $region35: #{fused_forward.1} parent=31 // pred_region
          %s209 = sadd.s32 %s22, %s23
          %s210 = smul.u32 32, %s209
          %p211 = scmp.lt.s32.totalorder %s21, 1
          %s212 = scalar_select %p211, %s21, 1
          %p213 = scmp.lt.s32.totalorder %s210, 31
          %s214 = scalar_select %p213, %s210, 31
          %s215 = smul.addr %s212, 32
          %s216 = sadd.s32 %s214, %s215
          %s217 = smul.addr %s216, 4
          %s218 = scalar_lea.vmem %s0, %s217
          %s219 = sadd.s32 %s22, %s23
          %s220 = smul.u32 32, %s219
        $region36: #{fused_forward.1} parent=31 // pred_fallthru
          _
      $region32: #{fused_forward.1} parent=5 // pred_fallthru
        _
      %p221 = scmp.le.s32.totalorder 1, %s14
      %p222 = scmp.lt.s32.totalorder %s14, 3
      %p223 = pnand %p221, %p222
      %p224 = pneg %p223
      // Predicated region
      $region37: #{fused_forward.1} parent=5 // pred_check
        _
      $region38: #{fused_forward.1} parent=5 // pred_check_branch
        %226 = sbr.rel (%p223) target = $region40
      $region39: #{fused_forward.1} parent=5 // pred_region
        %s227 = ssub.s32 %s14, 1
        %s228 = sadd.s32 %s25, %s26
        %s229 = smul.u32 32, %s228
        %p230 = scmp.lt.s32.totalorder %s24, 1
        %s231 = scalar_select %p230, %s24, 1
        %p232 = scmp.lt.s32.totalorder %s229, 31
        %s233 = scalar_select %p232, %s229, 31
        %s234 = smul.addr %s231, 32
        %s235 = sadd.s32 %s233, %s234
        %s236 = smul.addr %s235, 4
        %s237 = scalar_lea.vmem %s0, %s236
        %p238 = pneg %p63
        %p239 = pneg %p60
        %p240 = pneg %p84
        %p241 = pneg %p81
        %p242 = pneg %p105
        %p243 = pneg %p102
        %p244 = pneg %p126
        %p245 = pneg %p123
        %p246 = pneg %p147
        %p247 = pneg %p144
        %p248 = pneg %p175
        %p249 = pneg %p172
        %s250 = sand.u32 %s162, 1
        %s251 = scalar_lea.sflag [#allocation4], %s250
        %s252 = sand.u32 %s162, 1
        %s253 = scalar_lea.vmem [#allocation3], %s252
        %s254 = sadd.s32 %s25, %s26
        %s255 = smul.u32 32, %s254
        %p256 = scmp.lt.s32.totalorder %s24, 1
        %s257 = scalar_select %p256, %s24, 1
        %p258 = scmp.lt.s32.totalorder %s255, 31
        %s259 = scalar_select %p258, %s255, 31
        %s260 = smul.addr %s257, 32
        %s261 = sadd.s32 %s259, %s260
        %s262 = smul.addr %s261, 4
        %s263 = scalar_lea.vmem %s0, %s262
        %s264 = sadd.s32 %s25, %s26
        %s265 = smul.u32 32, %s264
        %s266 = sadd.s32 %s24, %s25
        %p268 = scmp.eq.s32.totalorder %s26, 0
        // Predicated region
        $region41: #{fused_forward.1} parent=39 // pred_check
          %p269 = pneg %p268
        $region42: #{fused_forward.1} parent=39 // pred_check_branch
          %271 = sbr.rel (%p269) target = $region44
        $region43: #{fused_forward.1} parent=39 // pred_region
          %272 = vst [vmem:[#allocation2] sm:$0xff] 0.0
        $region44: #{fused_forward.1} parent=39 // pred_fallthru
          _
        %v273 = vld [vmem:[%s263] sm:$0xf]
        %v274 = vld [vmem:[%s263 + $0x4] sm:$0xf]
        %v275 = vld [vmem:[%s263 + $0x8] sm:$0xf]
        %v276 = vld [vmem:[%s263 + $0xc] sm:$0xf]
        %v277 = vld [vmem:[%s263 + $0x10] sm:$0xf]
        %v278 = vld [vmem:[%s263 + $0x14] sm:$0xf]
        %v279 = vld [vmem:[%s263 + $0x18] sm:$0xf]
        %v280 = vld [vmem:[%s263 + $0x1c] sm:$0xf]
        %v281 = vld [vmem:[%s263 + $0x20] sm:$0xf]
        %v282 = vld [vmem:[%s263 + $0x24] sm:$0xf]
        %v283 = vld [vmem:[%s263 + $0x28] sm:$0xf]
        %v284 = vld [vmem:[%s263 + $0x2c] sm:$0xf]
        %v285 = vld [vmem:[%s263 + $0x30] sm:$0xf]
        %v286 = vld [vmem:[%s263 + $0x34] sm:$0xf]
        %v287 = vld [vmem:[%s263 + $0x38] sm:$0xf]
        %v288 = vld [vmem:[%s263 + $0x3c] sm:$0xf]
        %v289 = vld [vmem:[%s1] sm:$0xf]
        %v290 = vld [vmem:[%s1 + $0x4] sm:$0xf]
        %v291 = vld [vmem:[%s1 + $0x8] sm:$0xf]
        %v292 = vld [vmem:[%s1 + $0xc] sm:$0xf]
        %v293 = vld [vmem:[%s2] sm:$0x1]
        %v295 = vlaneseq
        %v296 = vshrl.u32 %v295, 7
        %v297 = vsub.s32 0, %v296
        %v298 = vrot.slane %v293, %v297
        %v316 = vunpack.c.l.b16 %v273
        %v317 = vunpack.c.l.b16 %v274
        %v318 = vunpack.c.l.b16 %v275
        %v319 = vunpack.c.l.b16 %v276
        %v320 = vunpack.c.l.b16 %v277
        %v321 = vunpack.c.l.b16 %v278
        %v322 = vunpack.c.l.b16 %v279
        %v323 = vunpack.c.l.b16 %v280
        %v324 = vunpack.c.l.b16 %v281
        %v325 = vunpack.c.l.b16 %v282
        %v326 = vunpack.c.l.b16 %v283
        %v327 = vunpack.c.l.b16 %v284
        %v328 = vunpack.c.l.b16 %v285
        %v329 = vunpack.c.l.b16 %v286
        %v330 = vunpack.c.l.b16 %v287
        %v331 = vunpack.c.l.b16 %v288
        %v332 = vpack.c.b16 %v317, %v316
        %v333 = vpack.c.b16 %v319, %v318
        %v334 = vpack.c.b16 %v321, %v320
        %v335 = vpack.c.b16 %v323, %v322
        %v336 = vpack.c.b16 %v325, %v324
        %v337 = vpack.c.b16 %v327, %v326
        %v338 = vpack.c.b16 %v329, %v328
        %v339 = vpack.c.b16 %v331, %v330
        %v344 = vunpack.c.l.b16 %v289
        %v345 = vunpack.c.l.b16 %v290
        %v346 = vunpack.c.l.b16 %v291
        %v347 = vunpack.c.l.b16 %v292
        %v348 = vpack.c.b16 %v345, %v344
        %v349 = vpack.c.b16 %v347, %v346
        %vm352 = vcmask 261120
        %v354 = vsel %vm352, %v332, 0
        %v357 = vsel %vm352, %v333, 0
        %v360 = vsel %vm352, %v334, 0
        %v363 = vsel %vm352, %v335, 0
        %v366 = vsel %vm352, %v336, 0
        %v369 = vsel %vm352, %v337, 0
        %v372 = vsel %vm352, %v338, 0
        %v375 = vsel %vm352, %v339, 0
        %377 = vmatprep.subr.bf16.mxu0 0
        %378 = vmatpush1.bf16.msra.mxu0 %v348
        %379 = vmatprep.subr.bf16.mxu0 0
        %380 = vmatpush1.bf16.msra.mxu0 %v349
        %381 = vmatprep.subr.bf16.mxu0 0
        %382 = vmatpush1.bf16.msra.mxu0 0
        %383 = vmatprep.subr.bf16.mxu0 0
        %384 = vmatpush1.bf16.msra.mxu0 0
        %385 = vmatprep.subr.bf16.mxu0 0
        %386 = vmatpush1.bf16.msra.mxu0 0
        %387 = vmatprep.subr.bf16.mxu0 0
        %388 = vmatpush1.bf16.msra.mxu0 0
        %389 = vmatprep.subr.bf16.mxu0 0
        %390 = vmatpush1.bf16.msra.mxu0 0
        %391 = vmatprep.subr.bf16.mxu0 0
        %392 = vmatpush1.bf16.msra.mxu0 0
        %393 = vmatprep.subr.bf16.mxu0 0
        %394 = vmatpush1.bf16.msra.mxu0 0
        %395 = vmatprep.subr.bf16.mxu0 0
        %396 = vmatpush1.bf16.msra.mxu0 0
        %397 = vmatprep.subr.bf16.mxu0 0
        %398 = vmatpush1.bf16.msra.mxu0 0
        %399 = vmatprep.subr.bf16.mxu0 0
        %400 = vmatpush1.bf16.msra.mxu0 0
        %401 = vmatprep.subr.bf16.mxu0 0
        %402 = vmatpush1.bf16.msra.mxu0 0
        %403 = vmatprep.subr.bf16.mxu0 0
        %404 = vmatpush1.bf16.msra.mxu0 0
        %405 = vmatprep.subr.bf16.mxu0 0
        %406 = vmatpush1.bf16.msra.mxu0 0
        %407 = vmatprep.subr.bf16.mxu0 0
        %408 = vmatpush1.bf16.msra.mxu0 0
        %409 = vmatprep.mubr.bf16.mxu0 0
        %410 = vmatmul.mubr.bf16.gmra.mrb[0].mxu0 %v354
        %v411 = vpop.f32.mrb[0].mxu0
        %v412 = vadd.f32 %v298, %v411
        %v413 = vpop.f32.mrb[0].mxu0
        %v414 = vpop.f32.mrb[0].mxu0
        %v415 = vadd.f32 %v298, %v414
        %v416 = vpop.f32.mrb[0].mxu0
        %417 = vmatprep.mubr.bf16.mxu0 0
        %418 = vmatmul.mubr.bf16.gmra.mrb[0].mxu0 %v357
        %v419 = vpop.f32.mrb[0].mxu0
        %v420 = vadd.f32 %v298, %v419
        %v421 = vpop.f32.mrb[0].mxu0
        %v422 = vpop.f32.mrb[0].mxu0
        %v423 = vadd.f32 %v298, %v422
        %v424 = vpop.f32.mrb[0].mxu0
        %425 = vmatprep.mubr.bf16.mxu0 0
        %426 = vmatmul.mubr.bf16.gmra.mrb[0].mxu0 %v360
        %v427 = vpop.f32.mrb[0].mxu0
        %v428 = vadd.f32 %v298, %v427
        %v429 = vpop.f32.mrb[0].mxu0
        %v430 = vpop.f32.mrb[0].mxu0
        %v431 = vadd.f32 %v298, %v430
        %v432 = vpop.f32.mrb[0].mxu0
        %433 = vmatprep.mubr.bf16.mxu0 0
        %434 = vmatmul.mubr.bf16.gmra.mrb[0].mxu0 %v363
        %v435 = vpop.f32.mrb[0].mxu0
        %v436 = vadd.f32 %v298, %v435
        %v437 = vpop.f32.mrb[0].mxu0
        %v438 = vpop.f32.mrb[0].mxu0
        %v439 = vadd.f32 %v298, %v438
        %v440 = vpop.f32.mrb[0].mxu0
        %441 = vmatprep.mubr.bf16.mxu0 0
        %442 = vmatmul.mubr.bf16.gmra.mrb[0].mxu0 %v366
        %v443 = vpop.f32.mrb[0].mxu0
        %v444 = vadd.f32 %v298, %v443
        %v445 = vpop.f32.mrb[0].mxu0
        %v446 = vpop.f32.mrb[0].mxu0
        %v447 = vadd.f32 %v298, %v446
        %v448 = vpop.f32.mrb[0].mxu0
        %449 = vmatprep.mubr.bf16.mxu0 0
        %450 = vmatmul.mubr.bf16.gmra.mrb[0].mxu0 %v369
        %v451 = vpop.f32.mrb[0].mxu0
        %v452 = vadd.f32 %v298, %v451
        %v453 = vpop.f32.mrb[0].mxu0
        %v454 = vpop.f32.mrb[0].mxu0
        %v455 = vadd.f32 %v298, %v454
        %v456 = vpop.f32.mrb[0].mxu0
        %457 = vmatprep.mubr.bf16.mxu0 0
        %458 = vmatmul.mubr.bf16.gmra.mrb[0].mxu0 %v372
        %v459 = vpop.f32.mrb[0].mxu0
        %v460 = vadd.f32 %v298, %v459
        %v461 = vpop.f32.mrb[0].mxu0
        %v462 = vpop.f32.mrb[0].mxu0
        %v463 = vadd.f32 %v298, %v462
        %v464 = vpop.f32.mrb[0].mxu0
        %465 = vmatprep.mubr.bf16.mxu0 0
        %466 = vmatmul.mubr.bf16.gmra.mrb[0].mxu0 %v375
        %v467 = vpop.f32.mrb[0].mxu0
        %v468 = vadd.f32 %v298, %v467
        %v469 = vpop.f32.mrb[0].mxu0
        %v470 = vpop.f32.mrb[0].mxu0
        %v471 = vadd.f32 %v298, %v470
        %v472 = vpop.f32.mrb[0].mxu0
        %473 = vdwg.mxu0
        %v474 = vmax.f32 %v412, 0.0
        %v475 = vmax.f32 %v415, 0.0
        %v476 = vmax.f32 %v420, 0.0
        %v477 = vmax.f32 %v423, 0.0
        %v478 = vmax.f32 %v428, 0.0
        %v479 = vmax.f32 %v431, 0.0
        %v480 = vmax.f32 %v436, 0.0
        %v481 = vmax.f32 %v439, 0.0
        %v482 = vmax.f32 %v444, 0.0
        %v483 = vmax.f32 %v447, 0.0
        %v484 = vmax.f32 %v452, 0.0
        %v485 = vmax.f32 %v455, 0.0
        %v486 = vmax.f32 %v460, 0.0
        %v487 = vmax.f32 %v463, 0.0
        %v488 = vmax.f32 %v468, 0.0
        %v489 = vmax.f32 %v471, 0.0
        %v490 = vadd.f32 %v474, %v475
        %v491 = vadd.f32 %v490, %v476
        %v492 = vadd.f32 %v491, %v477
        %v493 = vadd.f32 %v492, %v478
        %v494 = vadd.f32 %v493, %v479
        %v495 = vadd.f32 %v494, %v480
        %v496 = vadd.f32 %v495, %v481
        %v497 = vadd.f32 %v496, %v482
        %v498 = vadd.f32 %v497, %v483
        %v499 = vadd.f32 %v498, %v484
        %v500 = vadd.f32 %v499, %v485
        %v501 = vadd.f32 %v500, %v486
        %v502 = vadd.f32 %v501, %v487
        %v503 = vadd.f32 %v502, %v488
        %v504 = vadd.f32 %v503, %v489
        %v505 = vadd.f32 %v504, 0.0
        %s506 = scalar_lea.vmem %s263, 64
        %v507 = vld [vmem:[%s506] sm:$0xf]
        %v508 = vld [vmem:[%s506 + $0x4] sm:$0xf]
        %v509 = vld [vmem:[%s506 + $0x8] sm:$0xf]
        %v510 = vld [vmem:[%s506 + $0xc] sm:$0xf]
        %v511 = vld [vmem:[%s506 + $0x10] sm:$0xf]
        %v512 = vld [vmem:[%s506 + $0x14] sm:$0xf]
        %v513 = vld [vmem:[%s506 + $0x18] sm:$0xf]
        %v514 = vld [vmem:[%s506 + $0x1c] sm:$0xf]
        %v515 = vld [vmem:[%s506 + $0x20] sm:$0xf]
        %v516 = vld [vmem:[%s506 + $0x24] sm:$0xf]
        %v517 = vld [vmem:[%s506 + $0x28] sm:$0xf]
        %v518 = vld [vmem:[%s506 + $0x2c] sm:$0xf]
        %v519 = vld [vmem:[%s506 + $0x30] sm:$0xf]
        %v520 = vld [vmem:[%s506 + $0x34] sm:$0xf]
        %v521 = vld [vmem:[%s506 + $0x38] sm:$0xf]
        %v522 = vld [vmem:[%s506 + $0x3c] sm:$0xf]
        %v539 = vunpack.c.l.b16 %v507
        %v540 = vunpack.c.l.b16 %v508
        %v541 = vunpack.c.l.b16 %v509
        %v542 = vunpack.c.l.b16 %v510
        %v543 = vunpack.c.l.b16 %v511
        %v544 = vunpack.c.l.b16 %v512
        %v545 = vunpack.c.l.b16 %v513
        %v546 = vunpack.c.l.b16 %v514
        %v547 = vunpack.c.l.b16 %v515
        %v548 = vunpack.c.l.b16 %v516
        %v549 = vunpack.c.l.b16 %v517
        %v550 = vunpack.c.l.b16 %v518
        %v551 = vunpack.c.l.b16 %v519
        %v552 = vunpack.c.l.b16 %v520
        %v553 = vunpack.c.l.b16 %v521
        %v554 = vunpack.c.l.b16 %v522
        %v555 = vpack.c.b16 %v540, %v539
        %v556 = vpack.c.b16 %v542, %v541
        %v557 = vpack.c.b16 %v544, %v543
        %v558 = vpack.c.b16 %v546, %v545
        %v559 = vpack.c.b16 %v548, %v547
        %v560 = vpack.c.b16 %v550, %v549
        %v561 = vpack.c.b16 %v552, %v551
        %v562 = vpack.c.b16 %v554, %v553
        %v564 = vsel %vm352, %v555, 0
        %v567 = vsel %vm352, %v556, 0
        %v570 = vsel %vm352, %v557, 0
        %v573 = vsel %vm352, %v558, 0
        %v576 = vsel %vm352, %v559, 0
        %v579 = vsel %vm352, %v560, 0
        %v582 = vsel %vm352, %v561, 0
        %v585 = vsel %vm352, %v562, 0
        %587 = vmatprep.subr.bf16.mxu0 0
        %588 = vmatpush1.bf16.msra.mxu0 %v348
        %589 = vmatprep.subr.bf16.mxu0 0
        %590 = vmatpush1.bf16.msra.mxu0 %v349
        %591 = vmatprep.subr.bf16.mxu0 0
        %592 = vmatpush1.bf16.msra.mxu0 0
        %593 = vmatprep.subr.bf16.mxu0 0
        %594 = vmatpush1.bf16.msra.mxu0 0
        %595 = vmatprep.subr.bf16.mxu0 0
        %596 = vmatpush1.bf16.msra.mxu0 0
        %597 = vmatprep.subr.bf16.mxu0 0
        %598 = vmatpush1.bf16.msra.mxu0 0
        %599 = vmatprep.subr.bf16.mxu0 0
        %600 = vmatpush1.bf16.msra.mxu0 0
        %601 = vmatprep.subr.bf16.mxu0 0
        %602 = vmatpush1.bf16.msra.mxu0 0
        %603 = vmatprep.subr.bf16.mxu0 0
        %604 = vmatpush1.bf16.msra.mxu0 0
        %605 = vmatprep.subr.bf16.mxu0 0
        %606 = vmatpush1.bf16.msra.mxu0 0
        %607 = vmatprep.subr.bf16.mxu0 0
        %608 = vmatpush1.bf16.msra.mxu0 0
        %609 = vmatprep.subr.bf16.mxu0 0
        %610 = vmatpush1.bf16.msra.mxu0 0
        %611 = vmatprep.subr.bf16.mxu0 0
        %612 = vmatpush1.bf16.msra.mxu0 0
        %613 = vmatprep.subr.bf16.mxu0 0
        %614 = vmatpush1.bf16.msra.mxu0 0
        %615 = vmatprep.subr.bf16.mxu0 0
        %616 = vmatpush1.bf16.msra.mxu0 0
        %617 = vmatprep.subr.bf16.mxu0 0
        %618 = vmatpush1.bf16.msra.mxu0 0
        %619 = vmatprep.mubr.bf16.mxu0 0
        %620 = vmatmul.mubr.bf16.gmra.mrb[0].mxu0 %v564
        %v621 = vpop.f32.mrb[0].mxu0
        %v622 = vadd.f32 %v298, %v621
        %v623 = vpop.f32.mrb[0].mxu0
        %v624 = vpop.f32.mrb[0].mxu0
        %v625 = vadd.f32 %v298, %v624
        %v626 = vpop.f32.mrb[0].mxu0
        %627 = vmatprep.mubr.bf16.mxu0 0
        %628 = vmatmul.mubr.bf16.gmra.mrb[0].mxu0 %v567
        %v629 = vpop.f32.mrb[0].mxu0
        %v630 = vadd.f32 %v298, %v629
        %v631 = vpop.f32.mrb[0].mxu0
        %v632 = vpop.f32.mrb[0].mxu0
        %v633 = vadd.f32 %v298, %v632
        %v634 = vpop.f32.mrb[0].mxu0
        %635 = vmatprep.mubr.bf16.mxu0 0
        %636 = vmatmul.mubr.bf16.gmra.mrb[0].mxu0 %v570
        %v637 = vpop.f32.mrb[0].mxu0
        %v638 = vadd.f32 %v298, %v637
        %v639 = vpop.f32.mrb[0].mxu0
        %v640 = vpop.f32.mrb[0].mxu0
        %v641 = vadd.f32 %v298, %v640
        %v642 = vpop.f32.mrb[0].mxu0
        %643 = vmatprep.mubr.bf16.mxu0 0
        %644 = vmatmul.mubr.bf16.gmra.mrb[0].mxu0 %v573
        %v645 = vpop.f32.mrb[0].mxu0
        %v646 = vadd.f32 %v298, %v645
        %v647 = vpop.f32.mrb[0].mxu0
        %v648 = vpop.f32.mrb[0].mxu0
        %v649 = vadd.f32 %v298, %v648
        %v650 = vpop.f32.mrb[0].mxu0
        %651 = vmatprep.mubr.bf16.mxu0 0
        %652 = vmatmul.mubr.bf16.gmra.mrb[0].mxu0 %v576
        %v653 = vpop.f32.mrb[0].mxu0
        %v654 = vadd.f32 %v298, %v653
        %v655 = vpop.f32.mrb[0].mxu0
        %v656 = vpop.f32.mrb[0].mxu0
        %v657 = vadd.f32 %v298, %v656
        %v658 = vpop.f32.mrb[0].mxu0
        %659 = vmatprep.mubr.bf16.mxu0 0
        %660 = vmatmul.mubr.bf16.gmra.mrb[0].mxu0 %v579
        %v661 = vpop.f32.mrb[0].mxu0
        %v662 = vadd.f32 %v298, %v661
        %v663 = vpop.f32.mrb[0].mxu0
        %v664 = vpop.f32.mrb[0].mxu0
        %v665 = vadd.f32 %v298, %v664
        %v666 = vpop.f32.mrb[0].mxu0
        %667 = vmatprep.mubr.bf16.mxu0 0
        %668 = vmatmul.mubr.bf16.gmra.mrb[0].mxu0 %v582
        %v669 = vpop.f32.mrb[0].mxu0
        %v670 = vadd.f32 %v298, %v669
        %v671 = vpop.f32.mrb[0].mxu0
        %v672 = vpop.f32.mrb[0].mxu0
        %v673 = vadd.f32 %v298, %v672
        %v674 = vpop.f32.mrb[0].mxu0
        %675 = vmatprep.mubr.bf16.mxu0 0
        %676 = vmatmul.mubr.bf16.gmra.mrb[0].mxu0 %v585
        %v677 = vpop.f32.mrb[0].mxu0
        %v678 = vadd.f32 %v298, %v677
        %v679 = vpop.f32.mrb[0].mxu0
        %v680 = vpop.f32.mrb[0].mxu0
        %v681 = vadd.f32 %v298, %v680
        %v682 = vpop.f32.mrb[0].mxu0
        %683 = vdwg.mxu0
        %v684 = vmax.f32 %v622, 0.0
        %v685 = vmax.f32 %v625, 0.0
        %v686 = vmax.f32 %v630, 0.0
        %v687 = vmax.f32 %v633, 0.0
        %v688 = vmax.f32 %v638, 0.0
        %v689 = vmax.f32 %v641, 0.0
        %v690 = vmax.f32 %v646, 0.0
        %v691 = vmax.f32 %v649, 0.0
        %v692 = vmax.f32 %v654, 0.0
        %v693 = vmax.f32 %v657, 0.0
        %v694 = vmax.f32 %v662, 0.0
        %v695 = vmax.f32 %v665, 0.0
        %v696 = vmax.f32 %v670, 0.0
        %v697 = vmax.f32 %v673, 0.0
        %v698 = vmax.f32 %v678, 0.0
        %v699 = vmax.f32 %v681, 0.0
        %v700 = vadd.f32 %v684, %v685
        %v701 = vadd.f32 %v700, %v686
        %v702 = vadd.f32 %v701, %v687
        %v703 = vadd.f32 %v702, %v688
        %v704 = vadd.f32 %v703, %v689
        %v705 = vadd.f32 %v704, %v690
        %v706 = vadd.f32 %v705, %v691
        %v707 = vadd.f32 %v706, %v692
        %v708 = vadd.f32 %v707, %v693
        %v709 = vadd.f32 %v708, %v694
        %v710 = vadd.f32 %v709, %v695
        %v711 = vadd.f32 %v710, %v696
        %v712 = vadd.f32 %v711, %v697
        %v713 = vadd.f32 %v712, %v698
        %v714 = vadd.f32 %v713, %v699
        %v715 = vadd.f32 %v505, %v714
        %v716 = vld [vmem:[#allocation2] sm:$0xff]
        %v717 = vadd.f32 %v716, %v715
        %718 = vst [vmem:[#allocation2] sm:$0xff] %v717
        // Predicated region
        $region45: #{fused_forward.1} parent=39 // pred_check
          %p719 = pneg %p268
        $region46: #{fused_forward.1} parent=39 // pred_check_branch
          %721 = sbr.rel (%p719) target = $region48
        $region47: #{fused_forward.1} parent=39 // pred_region
          %v722 = vld [vmem:[#allocation2] sm:$0xff]
          %v723 = vrot.slane %v722, 4
          %v724 = vadd.f32 %v722, %v723
          %v725 = vrot.slane %v724, 2
          %v726 = vadd.f32 %v724, %v725
          %v727 = vrot.slane %v726, 1
          %v728 = vadd.f32 %v726, %v727
          %v729 = vmul.f32 %v728, 0.00390625
          %v730 = vpack.c.bf16 %v729, %v729
          %v731 = vld [vmem:[%s3] sm:$0xf]
          %v732 = vld [vmem:[%s3 + $0x4] sm:$0xf]
          %v733 = vld [vmem:[%s3 + $0x8] sm:$0xf]
          %v734 = vld [vmem:[%s3 + $0xc] sm:$0xf]
          %v735 = vld [vmem:[%s3 + $0x10] sm:$0xf]
          %v736 = vld [vmem:[%s3 + $0x14] sm:$0xf]
          %v737 = vld [vmem:[%s3 + $0x18] sm:$0xf]
          %v738 = vld [vmem:[%s3 + $0x1c] sm:$0xf]
          %v739 = vld [vmem:[%s3 + $0x20] sm:$0xf]
          %v740 = vld [vmem:[%s3 + $0x24] sm:$0xf]
          %v741 = vld [vmem:[%s3 + $0x28] sm:$0xf]
          %v742 = vld [vmem:[%s3 + $0x2c] sm:$0xf]
          %v743 = vld [vmem:[%s3 + $0x30] sm:$0xf]
          %v744 = vld [vmem:[%s3 + $0x34] sm:$0xf]
          %v745 = vld [vmem:[%s3 + $0x38] sm:$0xf]
          %v746 = vld [vmem:[%s3 + $0x3c] sm:$0xf]
          %p747 = scmp.eq.s32.totalorder %s25, 0
          %s748 = scalar_select %p747, 1, 0
          %s749 = scvt.s32.f32 %s748
          %v750 = vld [vmem:[%s4] sm:$0x1]
          %v751 = vstv %s749
          %v752 = vmul.f32 %v751, %v750
          %v769 = vunpack.c.l.b16 %v731
          %v770 = vunpack.c.l.b16 %v732
          %v771 = vunpack.c.l.b16 %v733
          %v772 = vunpack.c.l.b16 %v734
          %v773 = vunpack.c.l.b16 %v735
          %v774 = vunpack.c.l.b16 %v736
          %v775 = vunpack.c.l.b16 %v737
          %v776 = vunpack.c.l.b16 %v738
          %v777 = vunpack.c.l.b16 %v739
          %v778 = vunpack.c.l.b16 %v740
          %v779 = vunpack.c.l.b16 %v741
          %v780 = vunpack.c.l.b16 %v742
          %v781 = vunpack.c.l.b16 %v743
          %v782 = vunpack.c.l.b16 %v744
          %v783 = vunpack.c.l.b16 %v745
          %v784 = vunpack.c.l.b16 %v746
          %v785 = vpack.c.b16 %v770, %v769
          %v786 = vpack.c.b16 %v772, %v771
          %v787 = vpack.c.b16 %v774, %v773
          %v788 = vpack.c.b16 %v776, %v775
          %v789 = vpack.c.b16 %v778, %v777
          %v790 = vpack.c.b16 %v780, %v779
          %v791 = vpack.c.b16 %v782, %v781
          %v792 = vpack.c.b16 %v784, %v783
          %801 = vmatprep.subr.bf16.mxu0 0
          %802 = vmatpush1.bf16.msra.mxu0 %v785
          %803 = vmatprep.subr.bf16.mxu0 0
          %804 = vmatpush1.bf16.msra.mxu0 %v786
          %805 = vmatprep.subr.bf16.mxu0 0
          %806 = vmatpush1.bf16.msra.mxu0 %v787
          %807 = vmatprep.subr.bf16.mxu0 0
          %808 = vmatpush1.bf16.msra.mxu0 %v788
          %809 = vmatprep.subr.bf16.mxu0 0
          %810 = vmatpush1.bf16.msra.mxu0 %v789
          %811 = vmatprep.subr.bf16.mxu0 0
          %812 = vmatpush1.bf16.msra.mxu0 %v790
          %813 = vmatprep.subr.bf16.mxu0 0
          %814 = vmatpush1.bf16.msra.mxu0 %v791
          %815 = vmatprep.subr.bf16.mxu0 0
          %816 = vmatpush1.bf16.msra.mxu0 %v792
          %817 = vmatprep.subr.bf16.mxu0 0
          %818 = vmatpush1.bf16.msra.mxu0 0
          %819 = vmatprep.subr.bf16.mxu0 0
          %820 = vmatpush1.bf16.msra.mxu0 0
          %821 = vmatprep.subr.bf16.mxu0 0
          %822 = vmatpush1.bf16.msra.mxu0 0
          %823 = vmatprep.subr.bf16.mxu0 0
          %824 = vmatpush1.bf16.msra.mxu0 0
          %825 = vmatprep.subr.bf16.mxu0 0
          %826 = vmatpush1.bf16.msra.mxu0 0
          %827 = vmatprep.subr.bf16.mxu0 0
          %828 = vmatpush1.bf16.msra.mxu0 0
          %829 = vmatprep.subr.bf16.mxu0 0
          %830 = vmatpush1.bf16.msra.mxu0 0
          %831 = vmatprep.subr.bf16.mxu0 0
          %832 = vmatpush1.bf16.msra.mxu0 0
          %833 = vmatprep.mubr.bf16.mxu0 0
          %834 = vmatmul.mubr.bf16.gmra.mrb[0].mxu0 %v730
          %v835 = vpop.f32.mrb[0].mxu0
          %v836 = vadd.f32 %v752, %v835
          %v837 = vpop.f32.mrb[0].mxu0
          %v838 = vpop.f32.mrb[0].mxu0
          %v839 = vpop.f32.mrb[0].mxu0
          %840 = vdwg.mxu0
          %841 = vst [vmem:[%s253] sm:$0x1] %v836
        $region48: #{fused_forward.1} parent=39 // pred_fallthru
          _
        %s842 = sand.u32 %s162, 1
        %s843 = scalar_lea.sflag [#allocation4], %s842
        %s844 = sand.u32 %s162, 1
        %s845 = scalar_lea.vmem [#allocation3], %s844
        // Predicated region
        $region49: #{fused_forward.1} parent=39 // pred_check
          %p846 = pneg %p172
        $region50: #{fused_forward.1} parent=39 // pred_check_branch
          %848 = sbr.rel (%p846) target = $region52
        $region51: #{fused_forward.1} parent=39 // pred_region
          %s849 = sadd.s32 %s24, %s25
          %s851 = ssub.s32 16, 16
          %852 = vsyncadd %s843, %s851
          %s853 = smul.addr %s849, 16
          %s854 = scalar_lea.hbm %s5, %s853
          %s856 = sshll.u32 %s845, 4
          %s857 = int_to_ptr.vmem [resolvable:$true] %s856
          %859 = dma.vmem_to_hbm [thread:$0]  %s857, 16, %s854, %s843
        $region52: #{fused_forward.1} parent=39 // pred_fallthru
          _
      $region40: #{fused_forward.1} parent=5 // pred_fallthru
        _
      %p860 = scmp.le.s32.totalorder 2, %s14
      // Predicated region
      $region53: #{fused_forward.1} parent=5 // pred_check
        %p861 = pneg %p860
      $region54: #{fused_forward.1} parent=5 // pred_check_branch
        %863 = sbr.rel (%p861) target = $region56
      $region55: #{fused_forward.1} parent=5 // pred_region
        %s864 = ssub.s32 %s14, 2
        // Predicated region
        $region57: #{fused_forward.1} parent=55 // pred_check
          %p865 = pneg %p178
        $region58: #{fused_forward.1} parent=55 // pred_check_branch
          %867 = sbr.rel (%p865) target = $region60
        $region59: #{fused_forward.1} parent=55 // pred_region
          %s868 = sand.u32 %s163, 1
          %s869 = scalar_lea.sflag [#allocation4], %s868
          %s870 = sand.u32 %s163, 1
          %s871 = scalar_lea.vmem [#allocation3], %s870
          %872 = dma.done %s869, 16
        $region60: #{fused_forward.1} parent=55 // pred_fallthru
          _
      $region56: #{fused_forward.1} parent=5 // pred_fallthru
        _
    $region6: #{fused_forward.1} parent=1 // loop_footer
      %s18 = sadd.s32 1, %s14
    $region7: #{fused_forward.1} parent=1 // loop_footer_branch
      %13 = sbr.rel target = $region3
    $region8: #{fused_forward.1} parent=1 // loop_exit
      _
    %873 = vsyncpa [#allocation4], 1
    %s874 = scalar_lea.sflag [#allocation4], 1
    %875 = vsyncpa %s874, 1

</llo_original>
